<compile_context>
chip_gen: v7x
topology: tpu7x:2x2x1
jax: 0.10.0
libtpu: 0.0.40
codegen_flags: <defaults>
</compile_context>

<pallas_src>
import jax
import jax.numpy as jnp
import numpy as np
from jax.experimental import pallas as pl
from jax.experimental.pallas import tpu as pltpu


def _cdt_loss_kernel(x_ref, delta_ref, t_ref, wrow_ref, o_ref):
    x = x_ref[...].astype(jnp.float32)          # (TM, Cp); padded classes = -1e30
    scaled = x * delta_ref[...]                 # per-class temperature (delta pad = 1)

    # Numerically stable log-sum-exp over the class (lane) axis.
    m = jnp.max(scaled, axis=1, keepdims=True)                    # (TM, 1)
    ex = jnp.exp(scaled - m)                                      # pad lanes underflow to 0
    lse = m + jnp.log(jnp.sum(ex, axis=1, keepdims=True))         # (TM, 1)

    # Gather the target logit without materializing a one-hot.
    col = jax.lax.broadcasted_iota(jnp.int32, scaled.shape, 1)
    tgt_logit = jnp.sum(jnp.where(col == t_ref[...], scaled, jnp.float32(0.0)),
                        axis=1, keepdims=True)                    # (TM, 1)

    # Weighted per-row negative log-likelihood (weight is 0 for padded rows).
    o_ref[...] = wrow_ref[...] * (lse - tgt_logit)


def cdt_loss(x, target, delta_list, gamma=0.3, weight=None, reduction=None):
    """x: (N, C) float32/bfloat16 logits, target: (N,) int -> scalar loss."""
    x = jnp.asarray(x)
    if x.dtype != jnp.bfloat16:
        x = x.astype(jnp.float32)
    target = jnp.asarray(target, jnp.int32)
    n, c = x.shape

    # Delta_list = len(d) * d**gamma / sum(d**gamma)   (deterministic, host-side)
    d = np.asarray(delta_list, dtype=np.float64) ** gamma
    d = len(d) * d / d.sum()
    delta = jnp.asarray(d, jnp.float32)

    w = jnp.ones((c,), jnp.float32) if weight is None else jnp.asarray(weight, jnp.float32)

    # ---- class-axis padding (lane axis, multiple of 128) --------------------
    cpad = -c % 128
    Cp = c + cpad

    # ---- batch-axis tiling --------------------------------------------------
    # Keep each (TM, Cp) f32 working tile <= ~4 MiB, then balance TM across the
    # blocks so row padding never exceeds ~7 rows.
    bytes_per_row_f32 = Cp * 4
    tm_cap = max(8, ((4 << 20) // bytes_per_row_f32) // 8 * 8)
    n8 = -(-n // 8) * 8
    tm0 = int(min(1024, tm_cap, n8))
    nblk = -(-n // tm0)
    TM = (-(-n // nblk) + 7) // 8 * 8
    Np = nblk * TM
    npad = Np - n

    # Mask padded classes by padding the logits with -1e30 (delta pad stays 1.0
    # so the sentinel is preserved); padded rows are zeros and carry weight 0.
    x_p = jnp.pad(x, ((0, 0), (0, cpad)), constant_values=-1e30)
    x_p = jnp.pad(x_p, ((0, npad), (0, 0)))

    delta_p = jnp.pad(delta, (0, cpad), constant_values=1.0).reshape(1, Cp)
    t_p = jnp.pad(target, (0, npad)).reshape(Np, 1)

    # Per-row class weight gathered outside the kernel; zero for padded rows
    # (folds the row-validity mask into the weighting).
    w_row = jnp.take(w, target)
    w_row_p = jnp.pad(w_row, (0, npad)).reshape(Np, 1).astype(jnp.float32)

    per_row_loss = pl.pallas_call(
        _cdt_loss_kernel,
        out_shape=jax.ShapeDtypeStruct((Np, 1), jnp.float32),
        grid=(nblk,),
        in_specs=[
            pl.BlockSpec((TM, Cp), lambda i: (i, 0)),   # logits tile
            pl.BlockSpec((1, Cp), lambda i: (0, 0)),    # delta (broadcast)
            pl.BlockSpec((TM, 1), lambda i: (i, 0)),    # targets
            pl.BlockSpec((TM, 1), lambda i: (i, 0)),    # per-row weights
        ],
        out_specs=pl.BlockSpec((TM, 1), lambda i: (i, 0)),
        compiler_params=pltpu.CompilerParams(
            dimension_semantics=("parallel",),
            vmem_limit_bytes=40 * 1024 * 1024),
    )(x_p, delta_p, t_p, w_row_p)

    num = jnp.sum(per_row_loss)                 # tiny XLA reduce (4 bytes/row)
    if reduction == "sum":
        return num
    # PyTorch default 'mean' (weighted mean).
    return num / jnp.sum(w_row_p)


def _reference(x, target, delta_list, gamma=0.3, weight=None, reduction=None):
    d = np.asarray(delta_list, dtype=np.float64) ** gamma
    d = len(d) * d / d.sum()
    scaled = jnp.asarray(x, jnp.float32) * jnp.asarray(d, jnp.float32)
    logp = jax.nn.log_softmax(scaled, axis=-1)
    nll = -jnp.take_along_axis(logp, target[:, None], axis=-1)[:, 0]
    w = jnp.ones(scaled.shape[-1]) if weight is None else jnp.asarray(weight, jnp.float32)
    wr = w[target]
    if reduction == "sum":
        return jnp.sum(wr * nll)
    return jnp.sum(wr * nll) / jnp.sum(wr)


if __name__ == "__main__":
    key = jax.random.PRNGKey(0)
    kx, kt, kx2, kt2, kw2 = jax.random.split(key, 5)

    # --- small test: batch=6, classes=10, unweighted, mean + sum ------------
    N, C = 6, 10
    delta_list = [100, 80, 60, 50, 40, 30, 20, 15, 10, 5]
    x = jax.random.normal(kx, (N, C), jnp.float32)
    target = jax.random.randint(kt, (N,), 0, C, jnp.int32)

    loss_mean = jax.block_until_ready(cdt_loss(x, target, delta_list, gamma=0.3))
    loss_sum = jax.block_until_ready(
        cdt_loss(x, target, delta_list, gamma=0.3, reduction="sum"))
    ref_mean = _reference(x, target, delta_list, gamma=0.3)
    ref_sum = _reference(x, target, delta_list, gamma=0.3, reduction="sum")
    assert np.allclose(np.asarray(loss_mean), np.asarray(ref_mean), rtol=1e-5, atol=1e-5)
    assert np.allclose(np.asarray(loss_sum), np.asarray(ref_sum), rtol=1e-5, atol=1e-5)

    # --- larger test: multi-block parallel grid, class weights, weighted mean
    N2, C2 = 1200, 200
    delta_list2 = list(np.arange(C2, 0, -1) * 3 + 1)
    x2 = jax.random.normal(kx2, (N2, C2), jnp.float32)
    target2 = jax.random.randint(kt2, (N2,), 0, C2, jnp.int32)
    weight2 = jax.random.uniform(kw2, (C2,), jnp.float32, 0.5, 1.5)

    loss2 = jax.block_until_ready(
        cdt_loss(x2, target2, delta_list2, gamma=0.3, weight=weight2))
    ref2 = _reference(x2, target2, delta_list2, gamma=0.3, weight=weight2)
    assert np.allclose(np.asarray(loss2), np.asarray(ref2), rtol=1e-4, atol=1e-4)

    print("KERNEL_OK")
</pallas_src>

<mosaic_0001>
module attributes {stable_mosaic.version = 11 : i64} {
  func.func @_cdt_loss_kernel(%arg0: i32, %arg1: memref<8x128xf32, #tpu.memory_space<vmem>>, %arg2: memref<1x128xf32, #tpu.memory_space<vmem>>, %arg3: memref<8x1xi32, #tpu.memory_space<vmem>>, %arg4: memref<8x1xf32, #tpu.memory_space<vmem>>, %arg5: memref<8x1xf32, #tpu.memory_space<vmem>>) attributes {dimension_semantics = [#tpu.dimension_semantics<parallel>], iteration_bounds = array<i64: 1>, scalar_prefetch = 0 : i64, scratch_operands = 0 : i64, tpu.core_type = #tpu.core_type<tc>, window_params = [{transform_indices = @transform_0, window_bounds = array<i64: 8, 128>}, {pipeline_mode = #tpu.pipeline_mode<synchronous>, transform_indices = @transform_1, window_bounds = array<i64: 1, 128>}, {transform_indices = @transform_2, window_bounds = array<i64: 8, 1>}, {transform_indices = @transform_3, window_bounds = array<i64: 8, 1>}, {transform_indices = @transform_4, window_bounds = array<i64: 8, 1>}]} {
    %c0 = arith.constant 0 : index
    %c0_0 = arith.constant 0 : index
    %0 = vector.load %arg1[%c0, %c0_0] : memref<8x128xf32, #tpu.memory_space<vmem>>, vector<8x128xf32>
    %c0_1 = arith.constant 0 : index
    %c0_2 = arith.constant 0 : index
    %1 = vector.load %arg2[%c0_1, %c0_2] : memref<1x128xf32, #tpu.memory_space<vmem>>, vector<1x128xf32>
    %2 = vector.broadcast %1 : vector<1x128xf32> to vector<8x128xf32>
    %3 = arith.mulf %0, %2 : vector<8x128xf32>
    %cst = arith.constant dense<0xFF800000> : vector<8xf32>
    %4 = vector.multi_reduction <maximumf>, %3, %cst [1] : vector<8x128xf32> to vector<8xf32>
    %5 = vector.shape_cast %4 : vector<8xf32> to vector<8x1xf32>
    %6 = vector.broadcast %5 : vector<8x1xf32> to vector<8x128xf32>
    %7 = arith.subf %3, %6 : vector<8x128xf32>
    %8 = math.exp %7 : vector<8x128xf32>
    %cst_3 = arith.constant dense<0.000000e+00> : vector<8xf32>
    %9 = vector.multi_reduction <add>, %8, %cst_3 [1] : vector<8x128xf32> to vector<8xf32>
    %10 = vector.shape_cast %9 : vector<8xf32> to vector<8x1xf32>
    %11 = math.log %10 : vector<8x1xf32>
    %12 = arith.addf %5, %11 : vector<8x1xf32>
    %13 = tpu.iota {dimensions = array<i32: 1>} : vector<8x128xi32>
    %c0_4 = arith.constant 0 : index
    %c0_5 = arith.constant 0 : index
    %14 = vector.load %arg3[%c0_4, %c0_5] : memref<8x1xi32, #tpu.memory_space<vmem>>, vector<8x1xi32>
    %15 = vector.broadcast %14 : vector<8x1xi32> to vector<8x128xi32>
    %16 = arith.cmpi eq, %13, %15 : vector<8x128xi32>
    %cst_6 = arith.constant 0.000000e+00 : f32
    %17 = vector.broadcast %cst_6 : f32 to vector<8x128xf32>
    %18 = arith.select %16, %3, %17 : vector<8x128xi1>, vector<8x128xf32>
    %cst_7 = arith.constant dense<0.000000e+00> : vector<8xf32>
    %19 = vector.multi_reduction <add>, %18, %cst_7 [1] : vector<8x128xf32> to vector<8xf32>
    %20 = vector.shape_cast %19 : vector<8xf32> to vector<8x1xf32>
    %c0_8 = arith.constant 0 : index
    %c0_9 = arith.constant 0 : index
    %21 = vector.load %arg4[%c0_8, %c0_9] : memref<8x1xf32, #tpu.memory_space<vmem>>, vector<8x1xf32>
    %22 = arith.subf %12, %20 : vector<8x1xf32>
    %23 = arith.mulf %21, %22 : vector<8x1xf32>
    %c0_10 = arith.constant 0 : index
    %c0_11 = arith.constant 0 : index
    %24 = vector.load %arg5[%c0_10, %c0_11] : memref<8x1xf32, #tpu.memory_space<vmem>>, vector<8x1xf32>
    tpu.vector_store %arg5[%c0_10, %c0_11], %23 {strides = array<i32>} : memref<8x1xf32, #tpu.memory_space<vmem>>, vector<8x1xf32>,
    return
  }
  func.func @transform_0(%arg0: i32) -> (i32, i32) {
    %c0_i32 = arith.constant 0 : i32
    %c0_i32_0 = arith.constant 0 : i32
    return %arg0, %c0_i32 : i32, i32
  }
  func.func @transform_1(%arg0: i32) -> (i32, i32) {
    %c0_i32 = arith.constant 0 : i32
    %c0_i32_0 = arith.constant 0 : i32
    %c0_i32_1 = arith.constant 0 : i32
    return %c0_i32, %c0_i32_0 : i32, i32
  }
  func.func @transform_2(%arg0: i32) -> (i32, i32) {
    %c0_i32 = arith.constant 0 : i32
    %c0_i32_0 = arith.constant 0 : i32
    return %arg0, %c0_i32 : i32, i32
  }
  func.func @transform_3(%arg0: i32) -> (i32, i32) {
    %c0_i32 = arith.constant 0 : i32
    %c0_i32_0 = arith.constant 0 : i32
    return %arg0, %c0_i32 : i32, i32
  }
  func.func @transform_4(%arg0: i32) -> (i32, i32) {
    %c0_i32 = arith.constant 0 : i32
    %c0_i32_0 = arith.constant 0 : i32
    return %arg0, %c0_i32 : i32, i32
  }
}

</mosaic_0001>

<llo_original>
// kernel: tpu_custom_call.1
$region0: #{tpu_custom_call.1}
  #allocation0 [shape = 'u32[]', space=smem, size = 0x4, offset = 0x4, fixed_abs, tag = 'smem constant byte address 0x4 - core index']
  #allocation1 [shape = 'u32[144,128]{1,0:T(1,128)}', space=vmem, size = 0x12000, scoped, tag = 'internal scratch']
  %s0 = inlined_call_operand.vmem [shape: f32[8,128], index: 0, kind: input, shape index: {}]
  %s1 = inlined_call_operand.vmem [shape: f32[1,128], index: 1, kind: input, shape index: {}]
  %s2 = inlined_call_operand.vmem [shape: s32[8,1], index: 2, kind: input, shape index: {}]
  %s3 = inlined_call_operand.vmem [shape: f32[8,1], index: 3, kind: input, shape index: {}]
  %s4 = inlined_call_operand.vmem [shape: f32[8,1], index: 4, kind: output, shape index: {}]
  %s5 = sld [smem:[#allocation0]]
  $region26: #{tpu_custom_call.1} parent=0
    _
  %s7 = ssub.s32 1, %s5
  %s8 = scalar_select 0, %s7, %s5
  // Predicated region
  $region2: #{tpu_custom_call.1} parent=0 // pred_check
    _
  $region3: #{tpu_custom_call.1} parent=0 // pred_check_branch
    %10 = sbr.rel (0) target = $region5
  $region4: #{tpu_custom_call.1} parent=0 // pred_region
    _
  $region5: #{tpu_custom_call.1} parent=0 // pred_fallthru
    _
  // Predicated region
  $region6: #{tpu_custom_call.1} parent=0 // pred_check
    _
  $region7: #{tpu_custom_call.1} parent=0 // pred_check_branch
    %12 = sbr.rel (0) target = $region9
  $region8: #{tpu_custom_call.1} parent=0 // pred_region
    _
  $region9: #{tpu_custom_call.1} parent=0 // pred_fallthru
    _
  // Predicated region
  $region10: #{tpu_custom_call.1} parent=0 // pred_check
    _
  $region11: #{tpu_custom_call.1} parent=0 // pred_check_branch
    %14 = sbr.rel (0) target = $region13
  $region12: #{tpu_custom_call.1} parent=0 // pred_region
    _
  $region13: #{tpu_custom_call.1} parent=0 // pred_fallthru
    _
  // Predicated region
  $region14: #{tpu_custom_call.1} parent=0 // pred_check
    _
  $region15: #{tpu_custom_call.1} parent=0 // pred_check_branch
    %16 = sbr.rel (0) target = $region17
  $region16: #{tpu_custom_call.1} parent=0 // pred_region
    _
  $region17: #{tpu_custom_call.1} parent=0 // pred_fallthru
    _
  %v17 = vld [vmem:[%s0] sm:$0xff]
  %v18 = vld [vmem:[%s1] sm:$0x1]
  %v20 = vlaneseq
  %v21 = vshrl.u32 %v20, 7
  %v22 = vsub.s32 0, %v21
  %v23 = vrot.slane %v18, %v22
  %v25 = vmul.f32 %v17, %v23
  %26 = vmax.xlane.f32.xlu0 %v25
  %v27 = vpop.xlane.xlu0 %26
  %v28 = vsub.f32 %v25, %v27
  %v29 = vmul.f32 %v28, 1.442695
  %v30 = vpow.pop %v29
  %31 = vadd.xlane.f32.xlu0 %v30
  %v32 = vpop.xlane.xlu0 %31
  %v33 = vlog2.pop %v32
  %v34 = vmul.f32 %v33, 0.6931472
  %v35 = vadd.f32 %v27, %v34
  %v36 = vlaneseq
  %v37 = vand.u32 %v36, 127
  %v38 = vld [vmem:[%s2] sm:$0xff]
  %39 = vset.pattern.permute.xlu0 0
  %40 = vperm.xlu0 %39, %v38
  %v41 = vpop.permute.xlu0 %40
  %vm42 = vcmp.eq.s32.totalorder %v37, %v41
  %v43 = vsel %vm42, %v25, 0.0
  %44 = vadd.xlane.f32.xlu0 %v43
  %v45 = vpop.xlane.xlu0 %44
  %v46 = vld [vmem:[%s3] sm:$0xff]
  %v47 = vsub.f32 %v35, %v45
  %v48 = vmul.f32 %v46, %v47
  %vm49 = vcmask 7168
  %50 = vst.msk [vmem:[%s4] sm:$0xff] %vm49, %v48
  // Predicated region
  $region18: #{tpu_custom_call.1} parent=0 // pred_check
    _
  $region19: #{tpu_custom_call.1} parent=0 // pred_check_branch
    %52 = sbr.rel (0) target = $region21
  $region20: #{tpu_custom_call.1} parent=0 // pred_region
    _
  $region21: #{tpu_custom_call.1} parent=0 // pred_fallthru
    _
  // Predicated region
  $region22: #{tpu_custom_call.1} parent=0 // pred_check
    _
  $region23: #{tpu_custom_call.1} parent=0 // pred_check_branch
    %54 = sbr.rel (0) target = $region25
  $region24: #{tpu_custom_call.1} parent=0 // pred_region
    _
  $region25: #{tpu_custom_call.1} parent=0 // pred_fallthru
    _

</llo_original>
